<compile_context>
chip_gen: v5e
topology: v5e:2x2
jax: 0.10.0
libtpu: 0.0.40
codegen_flags: <defaults>
</compile_context>

<pallas_src>
import functools

import jax
import jax.numpy as jnp
import numpy as np
from jax.experimental import pallas as pl
from jax.experimental.pallas import tpu as pltpu


def _var_loss_kernel(pred_ref, lab_ref, out_ref, cnt_ref, sum_ref, *, d_var, inv_c):
    """Grid = (B, N_tiles): parallel over batch, accumulate over point tiles."""
    j = pl.program_id(1)

    @pl.when(j == 0)
    def _init():
        cnt_ref[...] = jnp.zeros_like(cnt_ref)
        sum_ref[...] = jnp.zeros_like(sum_ref)

    x = pred_ref[...]                                    # (1, C, TN) f32
    lab = lab_ref[...]                                   # (1, 1, TN) int32

    # Per-point pull-to-center term (independent of the label grouping):
    #   v[n] = relu(||x[:, n] - mean_c x[:, n]|| - d_var)^2
    center = jnp.sum(x, axis=1, keepdims=True) * inv_c   # (1, 1, TN)
    diff = x - center
    dist = jnp.sqrt(jnp.sum(diff * diff, axis=1, keepdims=True))
    v = jnp.maximum(dist - d_var, 0.0)
    v = v * v                                             # (1, 1, TN)

    # Value-space one-hot, O(L*N): hot[l, n] = (lab[n] == l).  Padded points
    # carry label -1 and therefore match no slot.
    L = cnt_ref.shape[1]
    liota = jax.lax.broadcasted_iota(jnp.int32, (1, L, lab.shape[2]), 1)
    hot = (lab == liota).astype(jnp.float32)              # (1, L, TN)

    cnt_ref[...] += jnp.sum(hot, axis=2, keepdims=True)       # group sizes
    sum_ref[...] += jnp.sum(hot * v, axis=2, keepdims=True)   # per-group sum of v

    @pl.when(j == pl.num_programs(1) - 1)
    def _finalize():
        counts = cnt_ref[...]                              # (1, L, 1)
        present = counts > 0.0
        # K_b: exact integer count of non-empty label slots, so the approx
        # (EUP) reciprocals below only ever see exact integer inputs.
        k = jnp.sum(present.astype(jnp.float32), axis=1, keepdims=True)   # (1,1,1)
        inv_counts = jnp.where(
            present,
            pl.reciprocal(jnp.maximum(counts, 1.0), approx=True),
            0.0,
        )
        per_group = sum_ref[...] * inv_counts              # (1, L, 1)
        loss_b = (jnp.sum(per_group, axis=1, keepdims=True)
                  * pl.reciprocal(k, approx=True))          # (1, 1, 1)
        # Lane-dense writeback: fill the 128-wide row, slice outside.
        out_ref[...] = jnp.broadcast_to(loss_b, out_ref.shape).astype(out_ref.dtype)


def var_loss_pallas(prediction, label, d_var, *, num_labels=None, tile_n=512):
    prediction = prediction.astype(jnp.float32)
    B, C, N = prediction.shape
    label = jnp.asarray(label, dtype=jnp.int32).reshape(B, 1, N)

    if num_labels is None:
        # Concrete-array shortcut; pass num_labels explicitly when jit-tracing.
        num_labels = int(jax.device_get(jnp.max(label))) + 1
    L = max(8, -(-num_labels // 8) * 8)          # label slots, sublane-aligned

    # Tile the point axis: lane-aligned, capped so VMEM stays O(B*(C+L)*TN).
    tn = max(128, min((int(tile_n) // 128) * 128, -(-N // 128) * 128))
    n_pad = -(-N // tn) * tn
    if n_pad != N:
        prediction = jnp.pad(prediction, ((0, 0), (0, 0), (0, n_pad - N)))
        # Padded points get label -1: they hit no one-hot slot, so they touch
        # neither the counts nor the per-group sums.
        label = jnp.pad(label, ((0, 0), (0, 0), (0, n_pad - N)), constant_values=-1)

    grid = (B, n_pad // tn)
    kernel = functools.partial(_var_loss_kernel, d_var=float(d_var), inv_c=1.0 / C)

    out = pl.pallas_call(
        kernel,
        out_shape=jax.ShapeDtypeStruct((B, 1, 128), jnp.float32),
        grid=grid,
        in_specs=[
            pl.BlockSpec((1, C, tn), lambda b, j: (b, 0, j)),
            pl.BlockSpec((1, 1, tn), lambda b, j: (b, 0, j)),
        ],
        out_specs=pl.BlockSpec((1, 1, 128), lambda b, j: (b, 0, 0)),
        scratch_shapes=[
            pltpu.VMEM((1, L, 1), jnp.float32),   # per-label-slot counts
            pltpu.VMEM((1, L, 1), jnp.float32),   # per-label-slot sum of v
        ],
        compiler_params=pltpu.CompilerParams(
            dimension_semantics=("parallel", "arbitrary"),
        ),
    )(prediction, label)

    # Per-batch partials -> scalar loss (sum over batch) in the wrapper.
    return jnp.sum(out[:, 0, 0])


def var_loss_ref(prediction, label, d_var):
    """Direct NumPy transcription of the PyTorch forward (for verification)."""
    pred = np.asarray(prediction, dtype=np.float64)
    lab = np.asarray(label)
    ret = 0.0
    for b in range(pred.shape[0]):
        uniq = np.unique(lab[b])
        inst = 0.0
        for u in uniq:
            mask = lab[b] == u
            point = pred[b][:, mask]                     # (C, M)
            center = point.mean(axis=0)                  # (M,)  mean over channels
            norm = np.linalg.norm(point - center, axis=0)
            inst += np.sum(np.maximum(norm - d_var, 0.0) ** 2) / point.shape[-1]
        ret += inst / uniq.shape[0]
    return ret


if __name__ == "__main__":
    B, C, N = 2, 4, 128
    d_var = 0.25

    key = jax.random.PRNGKey(0)
    k_pred, k_lab = jax.random.split(key)
    prediction = jax.random.normal(k_pred, (B, C, N), dtype=jnp.float32)
    label = jax.random.randint(k_lab, (B, N), 0, 5, dtype=jnp.int32)

    out = var_loss_pallas(prediction, label, d_var, num_labels=5)
    out = jax.block_until_ready(out)

    ref = var_loss_ref(prediction, label, d_var)
    # Tolerance budget covers the two EUP approx reciprocals (~2^-12 rel each);
    # a structural bug would be orders of magnitude larger.
    np.testing.assert_allclose(np.asarray(out), ref, rtol=2e-3, atol=1e-5)

    print("KERNEL_OK")
</pallas_src>

<mosaic_0001>
module attributes {stable_mosaic.version = 11 : i64} {
  func.func @_var_loss_kernel(%arg0: i32, %arg1: i32, %arg2: memref<1x4x128xf32, #tpu.memory_space<vmem>>, %arg3: memref<1x1x128xi32, #tpu.memory_space<vmem>>, %arg4: memref<1x1x128xf32, #tpu.memory_space<vmem>>, %arg5: memref<1x8x1xf32, #tpu.memory_space<vmem>>, %arg6: memref<1x8x1xf32, #tpu.memory_space<vmem>>) attributes {dimension_semantics = [#tpu.dimension_semantics<parallel>, #tpu.dimension_semantics<arbitrary>], iteration_bounds = array<i64: 2, 1>, scalar_prefetch = 0 : i64, scratch_operands = 2 : i64, tpu.core_type = #tpu.core_type<tc>, window_params = [{transform_indices = @transform_0, window_bounds = array<i64: 1, 4, 128>}, {transform_indices = @transform_1, window_bounds = array<i64: 1, 1, 128>}, {transform_indices = @transform_2, window_bounds = array<i64: 1, 1, 128>}]} {
    %c0_i32 = arith.constant 0 : i32
    %0 = arith.cmpi eq, %arg1, %c0_i32 : i32
    %1 = arith.extui %0 : i1 to i32
    %c0_i32_0 = arith.constant 0 : i32
    %2 = arith.cmpi ne, %1, %c0_i32_0 : i32
    scf.if %2 {
      %cst_26 = arith.constant 0.000000e+00 : f32
      %40 = vector.broadcast %cst_26 : f32 to vector<1x8x1xf32>
      %c0_27 = arith.constant 0 : index
      %c0_28 = arith.constant 0 : index
      %c0_29 = arith.constant 0 : index
      %41 = vector.load %arg5[%c0_27, %c0_28, %c0_29] : memref<1x8x1xf32, #tpu.memory_space<vmem>>, vector<1x8x1xf32>
      tpu.vector_store %arg5[%c0_27, %c0_28, %c0_29], %40 {strides = array<i32>} : memref<1x8x1xf32, #tpu.memory_space<vmem>>, vector<1x8x1xf32>,
      %cst_30 = arith.constant 0.000000e+00 : f32
      %42 = vector.broadcast %cst_30 : f32 to vector<1x8x1xf32>
      %c0_31 = arith.constant 0 : index
      %c0_32 = arith.constant 0 : index
      %c0_33 = arith.constant 0 : index
      %43 = vector.load %arg6[%c0_31, %c0_32, %c0_33] : memref<1x8x1xf32, #tpu.memory_space<vmem>>, vector<1x8x1xf32>
      tpu.vector_store %arg6[%c0_31, %c0_32, %c0_33], %42 {strides = array<i32>} : memref<1x8x1xf32, #tpu.memory_space<vmem>>, vector<1x8x1xf32>,
    } else {
    }
    %c0 = arith.constant 0 : index
    %c0_1 = arith.constant 0 : index
    %c0_2 = arith.constant 0 : index
    %3 = vector.load %arg2[%c0, %c0_1, %c0_2] : memref<1x4x128xf32, #tpu.memory_space<vmem>>, vector<1x4x128xf32>
    %c0_3 = arith.constant 0 : index
    %c0_4 = arith.constant 0 : index
    %c0_5 = arith.constant 0 : index
    %4 = vector.load %arg3[%c0_3, %c0_4, %c0_5] : memref<1x1x128xi32, #tpu.memory_space<vmem>>, vector<1x1x128xi32>
    %cst = arith.constant dense<0.000000e+00> : vector<1x128xf32>
    %5 = vector.multi_reduction <add>, %3, %cst [1] : vector<1x4x128xf32> to vector<1x128xf32>
    %6 = vector.shape_cast %5 : vector<1x128xf32> to vector<1x1x128xf32>
    %cst_6 = arith.constant 2.500000e-01 : f32
    %7 = vector.broadcast %cst_6 : f32 to vector<1x1x128xf32>
    %8 = arith.mulf %6, %7 : vector<1x1x128xf32>
    %9 = vector.broadcast %8 : vector<1x1x128xf32> to vector<1x4x128xf32>
    %10 = arith.subf %3, %9 : vector<1x4x128xf32>
    %11 = arith.mulf %10, %10 : vector<1x4x128xf32>
    %cst_7 = arith.constant dense<0.000000e+00> : vector<1x128xf32>
    %12 = vector.multi_reduction <add>, %11, %cst_7 [1] : vector<1x4x128xf32> to vector<1x128xf32>
    %13 = vector.shape_cast %12 : vector<1x128xf32> to vector<1x1x128xf32>
    %14 = math.sqrt %13 : vector<1x1x128xf32>
    %cst_8 = arith.constant 2.500000e-01 : f32
    %15 = vector.broadcast %cst_8 : f32 to vector<1x1x128xf32>
    %16 = arith.subf %14, %15 : vector<1x1x128xf32>
    %cst_9 = arith.constant 0.000000e+00 : f32
    %17 = vector.broadcast %cst_9 : f32 to vector<1x1x128xf32>
    %18 = arith.maximumf %16, %17 : vector<1x1x128xf32>
    %19 = arith.mulf %18, %18 : vector<1x1x128xf32>
    %20 = tpu.iota {dimensions = array<i32: 1>} : vector<1x8x128xi32>
    %21 = vector.broadcast %4 : vector<1x1x128xi32> to vector<1x8x128xi32>
    %22 = arith.cmpi eq, %21, %20 : vector<1x8x128xi32>
    %23 = arith.extui %22 : vector<1x8x128xi1> to vector<1x8x128xi32>
    %24 = arith.sitofp %23 : vector<1x8x128xi32> to vector<1x8x128xf32>
    %c0_10 = arith.constant 0 : index
    %c0_11 = arith.constant 0 : index
    %c0_12 = arith.constant 0 : index
    %25 = vector.load %arg5[%c0_10, %c0_11, %c0_12] : memref<1x8x1xf32, #tpu.memory_space<vmem>>, vector<1x8x1xf32>
    %cst_13 = arith.constant dense<0.000000e+00> : vector<1x8xf32>
    %26 = vector.multi_reduction <add>, %24, %cst_13 [2] : vector<1x8x128xf32> to vector<1x8xf32>
    %27 = vector.shape_cast %26 : vector<1x8xf32> to vector<1x8x1xf32>
    %28 = arith.addf %25, %27 : vector<1x8x1xf32>
    %c0_14 = arith.constant 0 : index
    %c0_15 = arith.constant 0 : index
    %c0_16 = arith.constant 0 : index
    %29 = vector.load %arg5[%c0_14, %c0_15, %c0_16] : memref<1x8x1xf32, #tpu.memory_space<vmem>>, vector<1x8x1xf32>
    tpu.vector_store %arg5[%c0_14, %c0_15, %c0_16], %28 {strides = array<i32>} : memref<1x8x1xf32, #tpu.memory_space<vmem>>, vector<1x8x1xf32>,
    %c0_17 = arith.constant 0 : index
    %c0_18 = arith.constant 0 : index
    %c0_19 = arith.constant 0 : index
    %30 = vector.load %arg6[%c0_17, %c0_18, %c0_19] : memref<1x8x1xf32, #tpu.memory_space<vmem>>, vector<1x8x1xf32>
    %31 = vector.broadcast %19 : vector<1x1x128xf32> to vector<1x8x128xf32>
    %32 = arith.mulf %24, %31 : vector<1x8x128xf32>
    %cst_20 = arith.constant dense<0.000000e+00> : vector<1x8xf32>
    %33 = vector.multi_reduction <add>, %32, %cst_20 [2] : vector<1x8x128xf32> to vector<1x8xf32>
    %34 = vector.shape_cast %33 : vector<1x8xf32> to vector<1x8x1xf32>
    %35 = arith.addf %30, %34 : vector<1x8x1xf32>
    %c0_21 = arith.constant 0 : index
    %c0_22 = arith.constant 0 : index
    %c0_23 = arith.constant 0 : index
    %36 = vector.load %arg6[%c0_21, %c0_22, %c0_23] : memref<1x8x1xf32, #tpu.memory_space<vmem>>, vector<1x8x1xf32>
    tpu.vector_store %arg6[%c0_21, %c0_22, %c0_23], %35 {strides = array<i32>} : memref<1x8x1xf32, #tpu.memory_space<vmem>>, vector<1x8x1xf32>,
    %c0_i32_24 = arith.constant 0 : i32
    %37 = arith.cmpi eq, %arg1, %c0_i32_24 : i32
    %38 = arith.extui %37 : i1 to i32
    %c0_i32_25 = arith.constant 0 : i32
    %39 = arith.cmpi ne, %38, %c0_i32_25 : i32
    scf.if %39 {
      %c0_26 = arith.constant 0 : index
      %c0_27 = arith.constant 0 : index
      %c0_28 = arith.constant 0 : index
      %40 = vector.load %arg5[%c0_26, %c0_27, %c0_28] : memref<1x8x1xf32, #tpu.memory_space<vmem>>, vector<1x8x1xf32>
      %cst_29 = arith.constant 0.000000e+00 : f32
      %41 = vector.broadcast %cst_29 : f32 to vector<1x8x1xf32>
      %42 = arith.cmpf ogt, %40, %41 : vector<1x8x1xf32>
      %43 = arith.extui %42 : vector<1x8x1xi1> to vector<1x8x1xi32>
      %44 = arith.sitofp %43 : vector<1x8x1xi32> to vector<1x8x1xf32>
      %cst_30 = arith.constant dense<0.000000e+00> : vector<1x1xf32>
      %45 = vector.multi_reduction <add>, %44, %cst_30 [1] : vector<1x8x1xf32> to vector<1x1xf32>
      %46 = vector.shape_cast %45 : vector<1x1xf32> to vector<1x1x1xf32>
      %cst_31 = arith.constant 1.000000e+00 : f32
      %47 = vector.broadcast %cst_31 : f32 to vector<1x8x1xf32>
      %48 = arith.maximumf %40, %47 : vector<1x8x1xf32>
      %49 = tpu.reciprocal %48 {approx = true} : vector<1x8x1xf32> -> vector<1x8x1xf32>
      %cst_32 = arith.constant 0.000000e+00 : f32
      %50 = vector.broadcast %cst_32 : f32 to vector<1x8x1xf32>
      %51 = arith.select %42, %49, %50 : vector<1x8x1xi1>, vector<1x8x1xf32>
      %c0_33 = arith.constant 0 : index
      %c0_34 = arith.constant 0 : index
      %c0_35 = arith.constant 0 : index
      %52 = vector.load %arg6[%c0_33, %c0_34, %c0_35] : memref<1x8x1xf32, #tpu.memory_space<vmem>>, vector<1x8x1xf32>
      %53 = arith.mulf %52, %51 : vector<1x8x1xf32>
      %cst_36 = arith.constant dense<0.000000e+00> : vector<1x1xf32>
      %54 = vector.multi_reduction <add>, %53, %cst_36 [1] : vector<1x8x1xf32> to vector<1x1xf32>
      %55 = vector.shape_cast %54 : vector<1x1xf32> to vector<1x1x1xf32>
      %56 = tpu.reciprocal %46 {approx = true} : vector<1x1x1xf32> -> vector<1x1x1xf32>
      %57 = arith.mulf %55, %56 : vector<1x1x1xf32>
      %58 = vector.shape_cast %57 : vector<1x1x1xf32> to vector<1x1x1xf32>
      %59 = vector.broadcast %58 : vector<1x1x1xf32> to vector<1x1x128xf32>
      %c0_37 = arith.constant 0 : index
      %c0_38 = arith.constant 0 : index
      %c0_39 = arith.constant 0 : index
      %60 = vector.load %arg4[%c0_37, %c0_38, %c0_39] : memref<1x1x128xf32, #tpu.memory_space<vmem>>, vector<1x1x128xf32>
      tpu.vector_store %arg4[%c0_37, %c0_38, %c0_39], %59 {strides = array<i32>} : memref<1x1x128xf32, #tpu.memory_space<vmem>>, vector<1x1x128xf32>,
    } else {
    }
    return
  }
  func.func @transform_0(%arg0: i32, %arg1: i32) -> (i32, i32, i32) {
    %c0_i32 = arith.constant 0 : i32
    %c0_i32_0 = arith.constant 0 : i32
    return %arg0, %c0_i32, %arg1 : i32, i32, i32
  }
  func.func @transform_1(%arg0: i32, %arg1: i32) -> (i32, i32, i32) {
    %c0_i32 = arith.constant 0 : i32
    %c0_i32_0 = arith.constant 0 : i32
    return %arg0, %c0_i32, %arg1 : i32, i32, i32
  }
  func.func @transform_2(%arg0: i32, %arg1: i32) -> (i32, i32, i32) {
    %c0_i32 = arith.constant 0 : i32
    %c0_i32_0 = arith.constant 0 : i32
    %c0_i32_1 = arith.constant 0 : i32
    return %arg0, %c0_i32, %c0_i32_0 : i32, i32, i32
  }
}

</mosaic_0001>

<llo_original>
// kernel: tpu_custom_call.1
$region0: #{tpu_custom_call.1}
  #allocation0 [shape = 'u32[]', space=smem, size = 0x4, offset = 0x4, fixed_abs, tag = 'smem constant byte address 0x4 - core index']
  #allocation1 [shape = 'u32[72,128]{1,0:T(1,128)}', space=vmem, size = 0x9000, scoped, tag = 'internal scratch']
  #allocation2 [shape = 'f32[1,8,1]{2,1,0:T(8,128)}', space=vmem, size = 0x1000, scoped, tag = 'scratch operand']
  #allocation3 [shape = 'f32[1,8,1]{2,1,0:T(8,128)}', space=vmem, size = 0x1000, scoped, tag = 'scratch operand']
  %s0 = inlined_call_operand.hbm [shape: f32[2,4,128], index: 0, kind: input, shape index: {}]
  %s1 = inlined_call_operand.hbm [shape: s32[2,1,128], index: 1, kind: input, shape index: {}]
  %s2 = inlined_call_operand.hbm [shape: f32[2,1,128], index: 2, kind: output, shape index: {}]
  %s3 = sld [smem:[#allocation0]]
  $region57: #{tpu_custom_call.1} parent=0
    _
  %s5 = ssub.s32 1, %s3
  %s6 = scalar_select 0, %s5, %s3
  $region1: #{tpu_custom_call.1} parent=0
    #allocation4 [shape = 'u8[4096]{0}', space=vmem, size = 0x1000, scoped, tag = 'input window, operand 0']
    #allocation5 [shape = 's32[2]{0}', space=sflag, size = 0x8, scoped, tag = 'scoped memory for tpu_custom_call.1']
    #allocation6 [shape = 's32[2]{0}', space=sflag, size = 0x8, scoped, tag = 'scoped memory for tpu_custom_call.1']
    #allocation7 [shape = 'u8[1024]{0}', space=vmem, size = 0x400, scoped, tag = 'input window, operand 1']
    #allocation8 [shape = 's32[2]{0}', space=sflag, size = 0x8, scoped, tag = 'scoped memory for tpu_custom_call.1']
    #allocation9 [shape = 'u8[1024]{0}', space=vmem, size = 0x400, scoped, tag = 'output window, operand 0']
    %7 = vsyncpa [#allocation5], 0
    %s8 = scalar_lea.sflag [#allocation5], 1
    %9 = vsyncpa %s8, 0
    %10 = vsyncpa [#allocation8], 0
    %s11 = scalar_lea.sflag [#allocation8], 1
    %12 = vsyncpa %s11, 0
    %13 = vsyncpa [#allocation6], 0
    %s14 = scalar_lea.sflag [#allocation6], 1
    %15 = vsyncpa %s14, 0
    loop: start=0, step=1, limit=4
    $region2: #{tpu_custom_call.1} parent=1 // loop_pre_header
      _
    $region3: #{tpu_custom_call.1} parent=1 // loop_header
      %s17 = sphi 0, %s21
      %p18 = scmp.ge.s32.totalorder %s17, 4
      %s24 = sphi 0, %s36
      %s25 = sphi 0, %s32
      %s26 = sphi 0, %s24
      %s27 = sphi 0, %s25
      %s28 = sphi 0, %s26
      %s29 = sphi 0, %s27
      %s41 = sphi 0, %s43
      %s44 = sphi 0, %s41
      %s45 = sphi 0, %s44
      %s61 = sphi 0, %s45
      %s69 = sphi 0, %s71
      %s72 = sphi 0, %s69
      %s73 = sphi 0, %s72
      %s89 = sphi 0, %s73
      %s95 = sphi 0, %s97
      %s98 = sphi 0, %s95
      %s99 = sphi 0, %s98
      %s115 = sphi 0, %s99
    $region4: #{tpu_custom_call.1} parent=1 // loop_header_branch
      %20 = sbr.rel (%p18) target = $region8
    $region5: #{tpu_custom_call.1} parent=1 // loop_body
      %s22 = ssub.s32 %s17, 1
      %s23 = ssub.s32 %s17, 2
      %s30 = sadd.s32 1, %s25
      %p31 = scmp.ge.s32.totalorder %s30, 1
      %s32 = scalar_select %p31, 0, %s30
      %s33 = sadd.s32 1, %s24
      %s34 = scalar_select %p31, %s33, %s24
      %p35 = scmp.ge.s32.totalorder %s34, 2
      %s36 = scalar_select %p35, 0, %s34
      %s37 = ssub.s32 %s24, %s36
      %s38 = ssub.s32 %s25, %s32
      %s39 = sor.u32 %s37, %s38
      %p40 = scmp.eq.s32.totalorder %s39, 0
      %s42 = sadd.s32 %s41, 1
      %s43 = scalar_select %p40, %s41, %s42
      %p46 = pneg %p40
      %p47 = scmp.eq.s32.totalorder %s17, 1
      %p48 = por %p46, %p47
      %p49 = scmp.ne.s32.totalorder %s41, %s44
      %p50 = scmp.eq.s32.totalorder %s17, 0
      %p51 = por %p49, %p50
      %p52 = scmp.ne.s32.totalorder %s41, %s44
      %p53 = scmp.eq.s32.totalorder %s22, 1
      %p54 = por %p52, %p53
      %p55 = scmp.ne.s32.totalorder %s44, %s45
      %p56 = scmp.eq.s32.totalorder %s22, 0
      %p57 = por %p55, %p56
      %p58 = scmp.ne.s32.totalorder %s44, %s45
      %p59 = scmp.eq.s32.totalorder %s23, 1
      %p60 = por %p58, %p59
      %p62 = scmp.ne.s32.totalorder %s45, %s61
      %p63 = scmp.eq.s32.totalorder %s23, 0
      %p64 = por %p62, %p63
      %s65 = ssub.s32 %s24, %s36
      %s66 = ssub.s32 %s25, %s32
      %s67 = sor.u32 %s65, %s66
      %p68 = scmp.eq.s32.totalorder %s67, 0
      %s70 = sadd.s32 %s69, 1
      %s71 = scalar_select %p68, %s69, %s70
      %p74 = pneg %p68
      %p75 = scmp.eq.s32.totalorder %s17, 1
      %p76 = por %p74, %p75
      %p77 = scmp.ne.s32.totalorder %s69, %s72
      %p78 = scmp.eq.s32.totalorder %s17, 0
      %p79 = por %p77, %p78
      %p80 = scmp.ne.s32.totalorder %s69, %s72
      %p81 = scmp.eq.s32.totalorder %s22, 1
      %p82 = por %p80, %p81
      %p83 = scmp.ne.s32.totalorder %s72, %s73
      %p84 = scmp.eq.s32.totalorder %s22, 0
      %p85 = por %p83, %p84
      %p86 = scmp.ne.s32.totalorder %s72, %s73
      %p87 = scmp.eq.s32.totalorder %s23, 1
      %p88 = por %p86, %p87
      %p90 = scmp.ne.s32.totalorder %s73, %s89
      %p91 = scmp.eq.s32.totalorder %s23, 0
      %p92 = por %p90, %p91
      %s93 = ssub.s32 %s24, %s36
      %p94 = scmp.eq.s32.totalorder %s93, 0
      %s96 = sadd.s32 %s95, 1
      %s97 = scalar_select %p94, %s95, %s96
      %p100 = pneg %p94
      %p101 = scmp.eq.s32.totalorder %s17, 1
      %p102 = por %p100, %p101
      %p103 = scmp.ne.s32.totalorder %s95, %s98
      %p104 = scmp.eq.s32.totalorder %s17, 0
      %p105 = por %p103, %p104
      %p106 = scmp.ne.s32.totalorder %s95, %s98
      %p107 = scmp.eq.s32.totalorder %s22, 1
      %p108 = por %p106, %p107
      %p109 = scmp.ne.s32.totalorder %s98, %s99
      %p110 = scmp.eq.s32.totalorder %s22, 0
      %p111 = por %p109, %p110
      %p112 = scmp.ne.s32.totalorder %s98, %s99
      %p113 = scmp.eq.s32.totalorder %s23, 1
      %p114 = por %p112, %p113
      %p116 = scmp.ne.s32.totalorder %s99, %s115
      %p117 = scmp.eq.s32.totalorder %s23, 0
      %p118 = por %p116, %p117
      %p119 = scmp.le.s32.totalorder 1, %s17
      %p120 = scmp.lt.s32.totalorder %s17, 3
      %p121 = pnand %p119, %p120
      %p122 = pneg %p121
      // Predicated region
      $region9: #{tpu_custom_call.1} parent=5 // pred_check
        _
      $region10: #{tpu_custom_call.1} parent=5 // pred_check_branch
        %124 = sbr.rel (%p121) target = $region12
      $region11: #{tpu_custom_call.1} parent=5 // pred_region
        %s125 = ssub.s32 %s17, 1
      $region12: #{tpu_custom_call.1} parent=5 // pred_fallthru
        _
      %p126 = scmp.lt.s32.totalorder %s17, 2
      // Predicated region
      $region13: #{tpu_custom_call.1} parent=5 // pred_check
        %p127 = pneg %p126
      $region14: #{tpu_custom_call.1} parent=5 // pred_check_branch
        %129 = sbr.rel (%p127) target = $region16
      $region15: #{tpu_custom_call.1} parent=5 // pred_region
        // Predicated region
        $region17: #{tpu_custom_call.1} parent=15 // pred_check
          %p130 = pneg %p51
        $region18: #{tpu_custom_call.1} parent=15 // pred_check_branch
          %132 = sbr.rel (%p130) target = $region20
        $region19: #{tpu_custom_call.1} parent=15 // pred_region
          %s133 = sand.u32 %s41, 1
          %s134 = scalar_lea.sflag [#allocation5], %s133
          %s135 = sand.u32 %s41, 1
          %s136 = smul.addr %s135, 4
          %s137 = scalar_lea.vmem [#allocation4], %s136
          %139 = vsyncadd %s134, 0
          %s140 = sadd.s32 %s25, %s24
          %s141 = smul.addr %s140, 4
          %s142 = scalar_lea.hbm %s0, %s141
          %s144 = sshll.u32 %s142, 4
          %s145 = int_to_ptr.hbm [resolvable:$true] %s144
          %s146 = sshll.u32 %s137, 4
          %s147 = int_to_ptr.vmem [resolvable:$true] %s146
          %149 = dma.hbm_to_vmem [thread:$0]  %s145, 64, %s147, %s134
        $region20: #{tpu_custom_call.1} parent=15 // pred_fallthru
          _
        // Predicated region
        $region21: #{tpu_custom_call.1} parent=15 // pred_check
          %p150 = pneg %p79
        $region22: #{tpu_custom_call.1} parent=15 // pred_check_branch
          %152 = sbr.rel (%p150) target = $region24
        $region23: #{tpu_custom_call.1} parent=15 // pred_region
          %s153 = sand.u32 %s69, 1
          %s154 = scalar_lea.sflag [#allocation8], %s153
          %s155 = sand.u32 %s69, 1
          %s156 = scalar_lea.vmem [#allocation7], %s155
          %158 = vsyncadd %s154, 0
          %s159 = sadd.s32 %s25, %s24
          %s160 = scalar_lea.hbm %s1, %s159
          %s162 = sshll.u32 %s160, 4
          %s163 = int_to_ptr.hbm [resolvable:$true] %s162
          %s164 = sshll.u32 %s156, 4
          %s165 = int_to_ptr.vmem [resolvable:$true] %s164
          %167 = dma.hbm_to_vmem [thread:$0]  %s163, 16, %s165, %s154
        $region24: #{tpu_custom_call.1} parent=15 // pred_fallthru
          _
      $region16: #{tpu_custom_call.1} parent=5 // pred_fallthru
        _
      %p168 = scmp.le.s32.totalorder 1, %s17
      %p169 = scmp.lt.s32.totalorder %s17, 3
      %p170 = pnand %p168, %p169
      %p171 = pneg %p170
      // Predicated region
      $region25: #{tpu_custom_call.1} parent=5 // pred_check
        _
      $region26: #{tpu_custom_call.1} parent=5 // pred_check_branch
        %173 = sbr.rel (%p170) target = $region28
      $region27: #{tpu_custom_call.1} parent=5 // pred_region
        %s174 = ssub.s32 %s17, 1
        %s175 = sand.u32 %s44, 1
        %s176 = scalar_lea.sflag [#allocation5], %s175
        %s177 = sand.u32 %s44, 1
        %s178 = smul.addr %s177, 4
        %s179 = scalar_lea.vmem [#allocation4], %s178
        // Predicated region
        $region29: #{tpu_custom_call.1} parent=27 // pred_check
          %p180 = pneg %p57
        $region30: #{tpu_custom_call.1} parent=27 // pred_check_branch
          %182 = sbr.rel (%p180) target = $region32
        $region31: #{tpu_custom_call.1} parent=27 // pred_region
          %184 = dma.done %s176, 64
        $region32: #{tpu_custom_call.1} parent=27 // pred_fallthru
          _
        %s185 = sand.u32 %s72, 1
        %s186 = scalar_lea.sflag [#allocation8], %s185
        %s187 = sand.u32 %s72, 1
        %s188 = scalar_lea.vmem [#allocation7], %s187
        // Predicated region
        $region33: #{tpu_custom_call.1} parent=27 // pred_check
          %p189 = pneg %p85
        $region34: #{tpu_custom_call.1} parent=27 // pred_check_branch
          %191 = sbr.rel (%p189) target = $region36
        $region35: #{tpu_custom_call.1} parent=27 // pred_region
          %193 = dma.done %s186, 16
        $region36: #{tpu_custom_call.1} parent=27 // pred_fallthru
          _
        %s194 = sand.u32 %s44, 1
        %s195 = scalar_lea.sflag [#allocation5], %s194
        %s196 = sand.u32 %s44, 1
        %s197 = smul.addr %s196, 4
        %s198 = scalar_lea.vmem [#allocation4], %s197
        %p199 = pneg %p57
        %p200 = pneg %p54
        %s201 = sand.u32 %s72, 1
        %s202 = scalar_lea.sflag [#allocation8], %s201
        %s203 = sand.u32 %s72, 1
        %s204 = scalar_lea.vmem [#allocation7], %s203
        %p205 = pneg %p85
        %p206 = pneg %p82
        %p207 = pneg %p111
        %p208 = pneg %p108
        %s209 = sand.u32 %s98, 1
        %s210 = scalar_lea.sflag [#allocation6], %s209
        %s211 = sand.u32 %s98, 1
        %s212 = scalar_lea.vmem [#allocation9], %s211
        %p213 = scmp.eq.s32.totalorder %s27, 0
        // Predicated region
        $region37: #{tpu_custom_call.1} parent=27 // pred_check
          %p214 = pneg %p213
        $region38: #{tpu_custom_call.1} parent=27 // pred_check_branch
          %216 = sbr.rel (%p214) target = $region40
        $region39: #{tpu_custom_call.1} parent=27 // pred_region
          %vm217 = vcmask 7168
          %218 = vst.msk [vmem:[#allocation2] sm:$0xff] %vm217, 0.0
          %219 = vst.msk [vmem:[#allocation3] sm:$0xff] %vm217, 0.0
        $region40: #{tpu_custom_call.1} parent=27 // pred_fallthru
          _
        %v220 = vld [vmem:[%s179] sm:$0xf]
        %v221 = vld [vmem:[%s188] sm:$0x1]
        %vm222 = vcmask 1043456
        %v223 = vsel %vm222, %v220, 0.0
        %v224 = vrot.slane %v223, 4
        %v225 = vadd.f32 %v223, %v224
        %v226 = vrot.slane %v225, 2
        %v227 = vadd.f32 %v225, %v226
        %v228 = vrot.slane %v227, 1
        %v229 = vadd.f32 %v227, %v228
        %v230 = vmul.f32 %v229, 0.25
        %v231 = vsub.f32 %v220, %v230
        %v232 = vmul.f32 %v231, %v231
        %v233 = vsel %vm222, %v232, 0.0
        %v234 = vrot.slane %v233, 4
        %v235 = vadd.f32 %v233, %v234
        %v236 = vrot.slane %v235, 2
        %v237 = vadd.f32 %v235, %v236
        %v238 = vrot.slane %v237, 1
        %v239 = vadd.f32 %v237, %v238
        %v240 = vrsqrt.pop %v239
        %v241 = vmul.f32 %v240, %v239
        %v242 = vmul.f32 %v241, %v240
        %v243 = vmul.f32 0.5, %v242
        %v244 = vsub.f32 1.5, %v243
        %v245 = vmul.f32 %v240, %v244
        %v246 = vmul.f32 %v239, %v245
        %vm247 = vcmp.eq.f32.partialorder %v239, inf
        %v248 = vsel %vm247, %v239, %v246
        %vm249 = vcmp.eq.f32.partialorder %v239, 0.0
        %v250 = vand.u32 %v239, 2147483648
        %v251 = vsel %vm249, %v250, %v248
        %v252 = vsub.f32 %v251, 0.25
        %v253 = vmax.f32 %v252, 0.0
        %v254 = vmul.f32 %v253, %v253
        %v255 = vlaneseq
        %v256 = vshrl.u32 %v255, 7
        %v257 = vperm.slane %v221, 0
        %vm258 = vcmp.eq.s32.totalorder %v257, %v256
        %v259 = vsel %vm258, 1, 0
        %v260 = vcvt.s32.f32 %v259
        %v261 = vld [vmem:[#allocation2] sm:$0xff]
        %262 = vadd.xlane.f32.xlu0 %v260
        %v263 = vpop.xlane.xlu0 %262
        %v264 = vadd.f32 %v261, %v263
        %vm265 = vcmask 7168
        %266 = vst.msk [vmem:[#allocation2] sm:$0xff] %vm265, %v264
        %v267 = vld [vmem:[#allocation3] sm:$0xff]
        %v268 = vmul.f32 %v260, %v254
        %269 = vadd.xlane.f32.xlu0 %v268
        %v270 = vpop.xlane.xlu0 %269
        %v271 = vadd.f32 %v267, %v270
        %272 = vst.msk [vmem:[#allocation3] sm:$0xff] %vm265, %v271
        // Predicated region
        $region41: #{tpu_custom_call.1} parent=27 // pred_check
          %p273 = pneg %p213
        $region42: #{tpu_custom_call.1} parent=27 // pred_check_branch
          %275 = sbr.rel (%p273) target = $region44
        $region43: #{tpu_custom_call.1} parent=27 // pred_region
          %v276 = vld [vmem:[#allocation2] sm:$0xff]
          %vm277 = vcmp.gt.f32.partialorder %v276, 0.0
          %v278 = vsel %vm277, 1, 0
          %v279 = vcvt.s32.f32 %v278
          %v280 = vsel %vm265, %v279, 0.0
          %v281 = vrot.slane %v280, 4
          %v282 = vadd.f32 %v280, %v281
          %v283 = vrot.slane %v282, 2
          %v284 = vadd.f32 %v282, %v283
          %v285 = vrot.slane %v284, 1
          %v286 = vadd.f32 %v284, %v285
          %v287 = vmax.f32 %v276, 1.0
          %v288 = vrcp.pop %v287
          %v289 = vsel %vm277, %v288, 0.0
          %v290 = vld [vmem:[#allocation3] sm:$0xff]
          %v291 = vmul.f32 %v290, %v289
          %v292 = vsel %vm265, %v291, 0.0
          %v293 = vrot.slane %v292, 4
          %v294 = vadd.f32 %v292, %v293
          %v295 = vrot.slane %v294, 2
          %v296 = vadd.f32 %v294, %v295
          %v297 = vrot.slane %v296, 1
          %v298 = vadd.f32 %v296, %v297
          %v299 = vrcp.pop %v286
          %v300 = vmul.f32 %v298, %v299
          %302 = vset.pattern.permute.xlu0 0
          %303 = vperm.xlu0 %302, %v300
          %v304 = vpop.permute.xlu0 %303
          %306 = vst [vmem:[%s212] sm:$0x1] %v304
        $region44: #{tpu_custom_call.1} parent=27 // pred_fallthru
          _
        %s307 = sand.u32 %s98, 1
        %s308 = scalar_lea.sflag [#allocation6], %s307
        %s309 = sand.u32 %s98, 1
        %s310 = scalar_lea.vmem [#allocation9], %s309
        // Predicated region
        $region45: #{tpu_custom_call.1} parent=27 // pred_check
          %p311 = pneg %p108
        $region46: #{tpu_custom_call.1} parent=27 // pred_check_branch
          %313 = sbr.rel (%p311) target = $region48
        $region47: #{tpu_custom_call.1} parent=27 // pred_region
          %315 = vsyncadd %s308, 0
          %s316 = scalar_lea.hbm %s2, %s26
          %s318 = sshll.u32 %s310, 4
          %s319 = int_to_ptr.vmem [resolvable:$true] %s318
          %s320 = sshll.u32 %s316, 4
          %s321 = int_to_ptr.hbm [resolvable:$true] %s320
          %323 = dma.vmem_to_hbm [thread:$0]  %s319, 16, %s321, %s308
        $region48: #{tpu_custom_call.1} parent=27 // pred_fallthru
          _
      $region28: #{tpu_custom_call.1} parent=5 // pred_fallthru
        _
      %p324 = scmp.le.s32.totalorder 2, %s17
      // Predicated region
      $region49: #{tpu_custom_call.1} parent=5 // pred_check
        %p325 = pneg %p324
      $region50: #{tpu_custom_call.1} parent=5 // pred_check_branch
        %327 = sbr.rel (%p325) target = $region52
      $region51: #{tpu_custom_call.1} parent=5 // pred_region
        %s328 = ssub.s32 %s17, 2
        // Predicated region
        $region53: #{tpu_custom_call.1} parent=51 // pred_check
          %p329 = pneg %p114
        $region54: #{tpu_custom_call.1} parent=51 // pred_check_branch
          %331 = sbr.rel (%p329) target = $region56
        $region55: #{tpu_custom_call.1} parent=51 // pred_region
          %s332 = sand.u32 %s99, 1
          %s333 = scalar_lea.sflag [#allocation6], %s332
          %s334 = sand.u32 %s99, 1
          %s335 = scalar_lea.vmem [#allocation9], %s334
          %337 = dma.done %s333, 16
        $region56: #{tpu_custom_call.1} parent=51 // pred_fallthru
          _
      $region52: #{tpu_custom_call.1} parent=5 // pred_fallthru
        _
    $region6: #{tpu_custom_call.1} parent=1 // loop_footer
      %s21 = sadd.s32 1, %s17
    $region7: #{tpu_custom_call.1} parent=1 // loop_footer_branch
      %16 = sbr.rel target = $region3
    $region8: #{tpu_custom_call.1} parent=1 // loop_exit
      _
    %338 = vsyncpa [#allocation5], 1
    %s339 = scalar_lea.sflag [#allocation5], 1
    %340 = vsyncpa %s339, 1
    %341 = vsyncpa [#allocation8], 1
    %s342 = scalar_lea.sflag [#allocation8], 1
    %343 = vsyncpa %s342, 1
    %344 = vsyncpa [#allocation6], 1
    %s345 = scalar_lea.sflag [#allocation6], 1
    %346 = vsyncpa %s345, 1

</llo_original>
